<compile_context>
chip_gen: v6e
topology: v6e:2x2x1
jax: 0.10.0
libtpu: 0.0.40
codegen_flags: <defaults>
</compile_context>

<pallas_src>
import functools

import jax
import jax.numpy as jnp
from jax import lax
from jax.experimental import pallas as pl
from jax.experimental.pallas import tpu as pltpu

LANE = 128             # lane width
SUB = 8                # sublane fold height for the resident accumulator
MAX_BLOCK_ROWS = 4096  # (4096,128) f32 = 2 MiB/buffer; 2 inputs x 2 bufs = 8 MiB


def _bce_elem(x, z):
    # Numerically stable BCE-with-logits, per element (matches PyTorch).
    return jnp.maximum(x, 0.0) - x * z + jnp.log1p(jnp.exp(-jnp.abs(x)))


def _focal_partial_kernel(preds_ref, labels_ref, out_ref, *,
                          num_blocks, steps, block_rows, tail_rows):
    p = pl.program_id(0)   # core split (parallel)
    j = pl.program_id(1)   # reduction steps (arbitrary)
    b = p * steps + j      # linear block index

    @pl.when(j == 0)
    def _init():
        out_ref[...] = jnp.zeros_like(out_ref)

    # Skip phantom steps (when num_blocks doesn't split evenly across cores).
    @pl.when(b < num_blocks)
    def _accum():
        x = preds_ref[...].astype(jnp.float32)
        z = labels_ref[...].astype(jnp.float32)
        pe = _bce_elem(x, z)

        def fold(v):
            # Lane-parallel accumulation into the resident (8,128) block:
            # vreg-wise adds only; the single cross-lane reduce is in the wrapper.
            return v.reshape(block_rows // SUB, SUB, LANE).sum(axis=0)

        if tail_rows:
            # Statically known: only the last block is partial.  Fast path for
            # every other block; masked path only at the boundary block.
            @pl.when(b != num_blocks - 1)
            def _full():
                out_ref[...] += fold(pe)

            @pl.when(b == num_blocks - 1)
            def _partial():
                r_iota = lax.broadcasted_iota(jnp.int32, (block_rows, LANE), 0)
                out_ref[...] += fold(jnp.where(r_iota < tail_rows, pe, 0.0))
        else:
            out_ref[...] += fold(pe)


def _min_sublanes(dtype):
    # Min tile sublane count per dtype width (f32: 8, bf16: 16, int8/fp8: 32).
    itemsize = jnp.dtype(dtype).itemsize
    return {4: 8, 2: 16, 1: 32}.get(itemsize, 8)


def _detect_ncores():
    # >1 only on megacore-style devices (e.g. v7x); safe fallback to 1.
    try:
        return max(1, int(getattr(jax.devices()[0], "num_cores", 1)))
    except Exception:
        return 1


def focal_loss(preds, labels, alpha=0.25, gamma=2.0, ncores=None):
    assert preds.shape == labels.shape
    total_n = preds.size

    flat_p = preds.reshape(-1)
    flat_l = labels.reshape(-1)

    # Alignment granule = min-tile rows (for the narrower input dtype) * 128 lanes.
    granule_rows = max(_min_sublanes(preds.dtype), _min_sublanes(labels.dtype))
    granule = granule_rows * LANE
    aligned_n = (total_n // granule) * granule

    # Tiny ragged tail (< one tile): plain jnp reduction, no full-array pad copy.
    tail_sum = jnp.float32(0.0)
    if aligned_n < total_n:
        xt = flat_p[aligned_n:].astype(jnp.float32)
        zt = flat_l[aligned_n:].astype(jnp.float32)
        tail_sum = jnp.sum(_bce_elem(xt, zt))

    if aligned_n == 0:
        bce_sum = tail_sum
    else:
        rows = aligned_n // LANE                  # multiple of granule_rows (>= 8)
        p2 = flat_p[:aligned_n].reshape(rows, LANE)
        l2 = flat_l[:aligned_n].reshape(rows, LANE)

        block_rows = min(MAX_BLOCK_ROWS, rows)    # multiple of 8 (and of 16 for bf16)
        num_blocks = pl.cdiv(rows, block_rows)
        tail_rows = rows % block_rows             # static; 0 => no masked path at all

        if ncores is None:
            ncores = _detect_ncores()
        ncores = max(1, min(int(ncores), num_blocks))
        steps = pl.cdiv(num_blocks, ncores)

        def in_map(pi, ji):
            # Clamp so phantom tail iterations re-read a valid block; their
            # contribution is skipped in-kernel via pl.when(b < num_blocks).
            return (jnp.minimum(pi * steps + ji, num_blocks - 1), 0)

        kernel = functools.partial(
            _focal_partial_kernel,
            num_blocks=num_blocks, steps=steps,
            block_rows=block_rows, tail_rows=tail_rows)

        in_bytes = (p2.size * p2.dtype.itemsize) + (l2.size * l2.dtype.itemsize)
        out_bytes = ncores * SUB * LANE * 4
        cost = pl.CostEstimate(
            flops=8 * aligned_n,
            transcendentals=2 * aligned_n,
            bytes_accessed=in_bytes + out_bytes)

        partials = pl.pallas_call(
            kernel,
            out_shape=jax.ShapeDtypeStruct((ncores * SUB, LANE), jnp.float32),
            grid_spec=pltpu.PrefetchScalarGridSpec(
                num_scalar_prefetch=0,
                grid=(ncores, steps),
                in_specs=[
                    pl.BlockSpec((block_rows, LANE), in_map),
                    pl.BlockSpec((block_rows, LANE), in_map),
                ],
                out_specs=pl.BlockSpec((SUB, LANE), lambda pi, ji: (pi, 0)),
            ),
            compiler_params=pltpu.CompilerParams(
                dimension_semantics=("parallel", "arbitrary"),
            ),
            cost_estimate=cost,
        )(p2, l2)

        bce_sum = jnp.sum(partials) + tail_sum

    # Tiny scalar epilogue: mean + focal transform (matches the PyTorch module).
    bce = bce_sum / jnp.float32(total_n)
    logpt = -bce
    pt = jnp.exp(logpt)
    one_minus_pt = jnp.maximum(1.0 - pt, 0.0)   # bce >= 0; guard fp rounding
    return -(one_minus_pt ** jnp.float32(gamma)) * jnp.float32(alpha) * logpt


def focal_loss_ref(preds, labels, alpha=0.25, gamma=2.0):
    x = preds.astype(jnp.float32)
    z = labels.astype(jnp.float32)
    bce = jnp.mean(_bce_elem(x, z))
    logpt = -bce
    pt = jnp.exp(logpt)
    return -((1.0 - pt) ** gamma) * alpha * logpt


if __name__ == "__main__":
    key = jax.random.PRNGKey(0)
    kp, kl = jax.random.split(key)

    # NCHW-like shapes as in typical segmentation use: [2, 4, 16, 16]
    preds = jax.random.normal(kp, (2, 4, 16, 16), dtype=jnp.float32)
    labels = (jax.random.uniform(kl, (2, 4, 16, 16)) > 0.5).astype(jnp.float32)

    out = focal_loss(preds, labels)
    out = jax.block_until_ready(out)

    ref = focal_loss_ref(preds, labels)
    assert jnp.allclose(out, ref, rtol=1e-5, atol=1e-6), (out, ref)

    print("KERNEL_OK")
</pallas_src>

<mosaic_0001>
module attributes {stable_mosaic.version = 11 : i64} {
  func.func @_focal_partial_kernel(%arg0: i32, %arg1: i32, %arg2: memref<16x128xf32, #tpu.memory_space<vmem>>, %arg3: memref<16x128xf32, #tpu.memory_space<vmem>>, %arg4: memref<8x128xf32, #tpu.memory_space<vmem>>) attributes {dimension_semantics = [#tpu.dimension_semantics<parallel>, #tpu.dimension_semantics<arbitrary>], iteration_bounds = array<i64: 1, 1>, scalar_prefetch = 0 : i64, scratch_operands = 0 : i64, tpu.core_type = #tpu.core_type<tc>, window_params = [{transform_indices = @transform_0, window_bounds = array<i64: 16, 128>}, {transform_indices = @transform_1, window_bounds = array<i64: 16, 128>}, {transform_indices = @transform_2, window_bounds = array<i64: 8, 128>}]} {
    %c1_i32 = arith.constant 1 : i32
    %0 = arith.muli %arg0, %c1_i32 : i32
    %1 = arith.addi %0, %arg1 : i32
    %c0_i32 = arith.constant 0 : i32
    %2 = arith.cmpi eq, %arg1, %c0_i32 : i32
    %3 = arith.extui %2 : i1 to i32
    %c0_i32_0 = arith.constant 0 : i32
    %4 = arith.cmpi ne, %3, %c0_i32_0 : i32
    scf.if %4 {
      %cst = arith.constant 0.000000e+00 : f32
      %8 = vector.broadcast %cst : f32 to vector<8x128xf32>
      %c0 = arith.constant 0 : index
      %c0_3 = arith.constant 0 : index
      %9 = vector.load %arg4[%c0, %c0_3] : memref<8x128xf32, #tpu.memory_space<vmem>>, vector<8x128xf32>
      tpu.vector_store %arg4[%c0, %c0_3], %8 {strides = array<i32>} : memref<8x128xf32, #tpu.memory_space<vmem>>, vector<8x128xf32>,
    } else {
    }
    %c1_i32_1 = arith.constant 1 : i32
    %5 = arith.cmpi slt, %1, %c1_i32_1 : i32
    %6 = arith.extui %5 : i1 to i32
    %c0_i32_2 = arith.constant 0 : i32
    %7 = arith.cmpi ne, %6, %c0_i32_2 : i32
    scf.if %7 {
      %c0 = arith.constant 0 : index
      %c0_3 = arith.constant 0 : index
      %8 = vector.load %arg2[%c0, %c0_3] : memref<16x128xf32, #tpu.memory_space<vmem>>, vector<16x128xf32>
      %c0_4 = arith.constant 0 : index
      %c0_5 = arith.constant 0 : index
      %9 = vector.load %arg3[%c0_4, %c0_5] : memref<16x128xf32, #tpu.memory_space<vmem>>, vector<16x128xf32>
      %cst = arith.constant 0.000000e+00 : f32
      %10 = vector.broadcast %cst : f32 to vector<16x128xf32>
      %11 = arith.maximumf %8, %10 : vector<16x128xf32>
      %12 = arith.mulf %8, %9 : vector<16x128xf32>
      %13 = arith.subf %11, %12 : vector<16x128xf32>
      %14 = math.absf %8 : vector<16x128xf32>
      %cst_6 = arith.constant 0.000000e+00 : f32
      %15 = vector.broadcast %cst_6 : f32 to vector<16x128xf32>
      %16 = arith.subf %15, %14 : vector<16x128xf32>
      %17 = math.exp %16 : vector<16x128xf32>
      %18 = math.log1p %17 : vector<16x128xf32>
      %19 = arith.addf %13, %18 : vector<16x128xf32>
      %c0_7 = arith.constant 0 : index
      %c0_8 = arith.constant 0 : index
      %20 = vector.load %arg4[%c0_7, %c0_8] : memref<8x128xf32, #tpu.memory_space<vmem>>, vector<8x128xf32>
      %21 = vector.shape_cast %19 : vector<16x128xf32> to vector<2x8x128xf32>
      %cst_9 = arith.constant dense<0.000000e+00> : vector<8x128xf32>
      %22 = vector.multi_reduction <add>, %21, %cst_9 [0] : vector<2x8x128xf32> to vector<8x128xf32>
      %23 = arith.addf %20, %22 : vector<8x128xf32>
      %c0_10 = arith.constant 0 : index
      %c0_11 = arith.constant 0 : index
      %24 = vector.load %arg4[%c0_10, %c0_11] : memref<8x128xf32, #tpu.memory_space<vmem>>, vector<8x128xf32>
      tpu.vector_store %arg4[%c0_10, %c0_11], %23 {strides = array<i32>} : memref<8x128xf32, #tpu.memory_space<vmem>>, vector<8x128xf32>,
    } else {
    }
    return
  }
  func.func @transform_0(%arg0: i32, %arg1: i32) -> (i32, i32) {
    %c1_i32 = arith.constant 1 : i32
    %0 = arith.muli %arg0, %c1_i32 : i32
    %1 = arith.addi %0, %arg1 : i32
    %c0_i32 = arith.constant 0 : i32
    %2 = arith.minsi %1, %c0_i32 : i32
    %c0_i32_0 = arith.constant 0 : i32
    %c0_i32_1 = arith.constant 0 : i32
    return %2, %c0_i32_0 : i32, i32
  }
  func.func @transform_1(%arg0: i32, %arg1: i32) -> (i32, i32) {
    %c1_i32 = arith.constant 1 : i32
    %0 = arith.muli %arg0, %c1_i32 : i32
    %1 = arith.addi %0, %arg1 : i32
    %c0_i32 = arith.constant 0 : i32
    %2 = arith.minsi %1, %c0_i32 : i32
    %c0_i32_0 = arith.constant 0 : i32
    %c0_i32_1 = arith.constant 0 : i32
    return %2, %c0_i32_0 : i32, i32
  }
  func.func @transform_2(%arg0: i32, %arg1: i32) -> (i32, i32) {
    %c0_i32 = arith.constant 0 : i32
    %c0_i32_0 = arith.constant 0 : i32
    return %arg0, %c0_i32 : i32, i32
  }
}

</mosaic_0001>

<llo_original>
// kernel: tpu_custom_call.1
$region0: #{tpu_custom_call.1}
  #allocation0 [shape = 'u32[]', space=smem, size = 0x4, offset = 0x4, fixed_abs, tag = 'smem constant byte address 0x4 - core index']
  #allocation1 [shape = 'u32[144,128]{1,0:T(1,128)}', space=vmem, size = 0x12000, scoped, tag = 'internal scratch']
  %s0 = inlined_call_operand.hbm [shape: f32[16,128], index: 0, kind: input, shape index: {}]
  %s1 = inlined_call_operand.hbm [shape: f32[16,128], index: 1, kind: input, shape index: {}]
  %s2 = inlined_call_operand.hbm [shape: f32[8,128], index: 2, kind: output, shape index: {}]
  %s3 = sld [smem:[#allocation0]]
  $region34: #{tpu_custom_call.1} parent=0
    _
  %s5 = ssub.s32 1, %s3
  %s6 = scalar_select 0, %s5, %s3
  $region1: #{tpu_custom_call.1} parent=0
    #allocation2 [shape = 'u8[8192]{0}', space=vmem, size = 0x2000, scoped, tag = 'input window, operand 0, single buffered']
    #allocation3 [shape = 's32[1]{0}', space=sflag, size = 0x4, scoped, tag = 'scoped memory for tpu_custom_call.1']
    #allocation4 [shape = 's32[1]{0}', space=sflag, size = 0x4, scoped, tag = 'scoped memory for tpu_custom_call.1']
    #allocation5 [shape = 'u8[8192]{0}', space=vmem, size = 0x2000, scoped, tag = 'input window, operand 1, single buffered']
    #allocation6 [shape = 's32[1]{0}', space=sflag, size = 0x4, scoped, tag = 'scoped memory for tpu_custom_call.1']
    #allocation7 [shape = 'u8[4096]{0}', space=vmem, size = 0x1000, scoped, tag = 'output window, operand 0, single buffered']
    %7 = vsyncpa [#allocation3], 0
    %8 = vsyncpa [#allocation6], 0
    %9 = vsyncpa [#allocation4], 0
    // Predicated region
    $region2: #{tpu_custom_call.1} parent=1 // pred_check
      _
    $region3: #{tpu_custom_call.1} parent=1 // pred_check_branch
      %11 = sbr.rel (0) target = $region5
    $region4: #{tpu_custom_call.1} parent=1 // pred_region
      %s12 = sadd.s32 0, 0
      %p13 = scmp.lt.s32.totalorder %s12, 0
      %s14 = scalar_select %p13, %s12, 0
      %s15 = smul.u32 2, %s14
      %s17 = ssub.s32 256, 256
      %18 = vsyncadd [#allocation3], %s17
      %s19 = smul.addr %s15, 128
      %s20 = scalar_lea.hbm %s0, %s19
      %s21 = sshll.u32 [#allocation2], 4
      %s22 = int_to_ptr.vmem [resolvable:$true] %s21
      %27 = dma.hbm_to_vmem [thread:$0]  %s20, 256, %s22, [#allocation3], 128, 128, 8
    $region5: #{tpu_custom_call.1} parent=1 // pred_fallthru
      _
    // Predicated region
    $region6: #{tpu_custom_call.1} parent=1 // pred_check
      _
    $region7: #{tpu_custom_call.1} parent=1 // pred_check_branch
      %29 = sbr.rel (0) target = $region9
    $region8: #{tpu_custom_call.1} parent=1 // pred_region
      %s30 = sadd.s32 0, 0
      %p31 = scmp.lt.s32.totalorder %s30, 0
      %s32 = scalar_select %p31, %s30, 0
      %s33 = smul.u32 2, %s32
      %s35 = ssub.s32 256, 256
      %36 = vsyncadd [#allocation6], %s35
      %s37 = smul.addr %s33, 128
      %s38 = scalar_lea.hbm %s1, %s37
      %s39 = sshll.u32 [#allocation5], 4
      %s40 = int_to_ptr.vmem [resolvable:$true] %s39
      %45 = dma.hbm_to_vmem [thread:$0]  %s38, 256, %s40, [#allocation6], 128, 128, 8
    $region9: #{tpu_custom_call.1} parent=1 // pred_fallthru
      _
    // Predicated region
    $region10: #{tpu_custom_call.1} parent=1 // pred_check
      _
    $region11: #{tpu_custom_call.1} parent=1 // pred_check_branch
      %47 = sbr.rel (0) target = $region13
    $region12: #{tpu_custom_call.1} parent=1 // pred_region
      %48 = dma.done [#allocation3], 256
    $region13: #{tpu_custom_call.1} parent=1 // pred_fallthru
      _
    // Predicated region
    $region14: #{tpu_custom_call.1} parent=1 // pred_check
      _
    $region15: #{tpu_custom_call.1} parent=1 // pred_check_branch
      %50 = sbr.rel (0) target = $region17
    $region16: #{tpu_custom_call.1} parent=1 // pred_region
      %51 = dma.done [#allocation6], 256
    $region17: #{tpu_custom_call.1} parent=1 // pred_fallthru
      _
    %s52 = sadd.s32 0, 0
    %p53 = scmp.lt.s32.totalorder %s52, 0
    %s54 = scalar_select %p53, %s52, 0
    %s55 = smul.u32 2, %s54
    %s56 = sadd.s32 0, 0
    %p57 = scmp.lt.s32.totalorder %s56, 0
    %s58 = scalar_select %p57, %s56, 0
    %s59 = smul.u32 2, %s58
    %s60 = sadd.s32 0, 0
    %p61 = scmp.eq.s32.totalorder 0, 0
    // Predicated region
    $region18: #{tpu_custom_call.1} parent=1 // pred_check
      %p62 = pneg %p61
    $region19: #{tpu_custom_call.1} parent=1 // pred_check_branch
      %64 = sbr.rel (%p62) target = $region21
    $region20: #{tpu_custom_call.1} parent=1 // pred_region
      %65 = vst [vmem:[#allocation7] sm:$0xff] 0.0
    $region21: #{tpu_custom_call.1} parent=1 // pred_fallthru
      _
    %p66 = scmp.lt.s32.totalorder %s60, 1
    // Predicated region
    $region22: #{tpu_custom_call.1} parent=1 // pred_check
      %p67 = pneg %p66
    $region23: #{tpu_custom_call.1} parent=1 // pred_check_branch
      %69 = sbr.rel (%p67) target = $region25
    $region24: #{tpu_custom_call.1} parent=1 // pred_region
      %v70 = vld [vmem:[#allocation2] sm:$0xff]
      %v71 = vld [vmem:[#allocation2 + $0x8] sm:$0xff]
      %v72 = vld [vmem:[#allocation5] sm:$0xff]
      %v73 = vld [vmem:[#allocation5 + $0x8] sm:$0xff]
      %v74 = vmax.f32 %v70, 0.0
      %v75 = vmax.f32 %v71, 0.0
      %v76 = vmul.f32 %v70, %v72
      %v77 = vmul.f32 %v71, %v73
      %v78 = vsub.f32 %v74, %v76
      %v79 = vsub.f32 %v75, %v77
      %v80 = vand.u32 2147483647, %v70
      %v81 = vand.u32 2147483647, %v71
      %v82 = vsub.f32 0.0, %v80
      %v83 = vsub.f32 0.0, %v81
      %v84 = vmul.f32 %v82, 1.442695
      %v85 = vpow.pop %v84
      %v86 = vmul.f32 %v83, 1.442695
      %v87 = vpow.pop %v86
      %v88 = vadd.f32 %v85, 1.0
      %v89 = vlog2.pop %v88
      %v90 = vmul.f32 %v89, 0.6931472
      %v91 = vmul.f32 -0.5, %v85
      %v92 = vadd.f32 %v91, 1.0
      %v93 = vmul.f32 %v92, %v85
      %v94 = vand.u32 2147483647, %v85
      %vm95 = vcmp.lt.f32.partialorder %v94, 0.0004427343
      %v96 = vsel %vm95, %v93, %v90
      %v97 = vadd.f32 %v87, 1.0
      %v98 = vlog2.pop %v97
      %v99 = vmul.f32 %v98, 0.6931472
      %v100 = vmul.f32 -0.5, %v87
      %v101 = vadd.f32 %v100, 1.0
      %v102 = vmul.f32 %v101, %v87
      %v103 = vand.u32 2147483647, %v87
      %vm104 = vcmp.lt.f32.partialorder %v103, 0.0004427343
      %v105 = vsel %vm104, %v102, %v99
      %v106 = vadd.f32 %v78, %v96
      %v107 = vadd.f32 %v79, %v105
      %v108 = vld [vmem:[#allocation7] sm:$0xff]
      %v109 = vadd.f32 %v106, %v107
      %v110 = vadd.f32 %v108, %v109
      %111 = vst [vmem:[#allocation7] sm:$0xff] %v110
    $region25: #{tpu_custom_call.1} parent=1 // pred_fallthru
      _
    // Predicated region
    $region26: #{tpu_custom_call.1} parent=1 // pred_check
      _
    $region27: #{tpu_custom_call.1} parent=1 // pred_check_branch
      %113 = sbr.rel (0) target = $region29
    $region28: #{tpu_custom_call.1} parent=1 // pred_region
      %s115 = ssub.s32 128, 128
      %116 = vsyncadd [#allocation4], %s115
      %s118 = sshll.u32 [#allocation7], 4
      %s119 = int_to_ptr.vmem [resolvable:$true] %s118
      %121 = dma.vmem_to_hbm [thread:$0]  %s119, 128, %s2, [#allocation4]
    $region29: #{tpu_custom_call.1} parent=1 // pred_fallthru
      _
    // Predicated region
    $region30: #{tpu_custom_call.1} parent=1 // pred_check
      _
    $region31: #{tpu_custom_call.1} parent=1 // pred_check_branch
      %123 = sbr.rel (0) target = $region33
    $region32: #{tpu_custom_call.1} parent=1 // pred_region
      %124 = dma.done [#allocation4], 128
    $region33: #{tpu_custom_call.1} parent=1 // pred_fallthru
      _
    %125 = vsyncpa [#allocation3], 1
    %126 = vsyncpa [#allocation6], 1
    %127 = vsyncpa [#allocation4], 1

</llo_original>
